<compile_context>
chip_gen: v5e
topology: v5e:2x2
jax: 0.10.0
libtpu: 0.0.40
codegen_flags: <defaults>
</compile_context>

<pallas_src>
import functools
import math

import numpy as np

import jax
import jax.numpy as jnp
from jax import lax
from jax.experimental import pallas as pl
from jax.experimental.pallas import tpu as pltpu

_OUT_LANES = 128   # lane-dense packed output width (>= O + 2H)
_ROW_ALIGN = 8     # sublane alignment for packed weight K-dims


def _rnn_username_kernel(u_ref, x_ref, h_ref, c_ref, wg_ref, wp_ref, out_ref):
    """One fused LSTM-cell step + Linear head, single MXU op per matmul.

    u_ref:  (1, U)        username encoding
    x_ref:  (1, I)        input (one-hot letter)
    h_ref:  (1, 1, H)     previous hidden state
    c_ref:  (1, 1, H)     previous cell state
    wg_ref: (K1, 4H)      [W_ih^T over (u,x) ; W_hh^T ; b_ih+b_hh ; 0-pad],
                          gate columns ordered [i, f, o, g], K1 = 8-aligned(U+I+H+1)
    wp_ref: (K2, 128)     [W_lin^T ; 0 ; b_lin ; 0-pad] in cols [0,O),
                          I_H (copies h) in cols [O,O+H), I_H (copies c) in
                          cols [O+H,O+2H), zeros elsewhere, K2 = 8-aligned(2H+1)
    out_ref: (1, 128)     [output(O) | h_new(H) | c_new(H) | zero pad]
    """
    U = u_ref.shape[1]
    I = x_ref.shape[1]
    H = h_ref.shape[2]
    UIH = U + I + H
    k_gate = wg_ref.shape[0]
    k_head = wp_ref.shape[0]

    # Constant tails [1, 0, ..., 0]: the 1 lane multiplies the fused-bias row
    # of the packed weight (bias folded into the MXU accumulation); the extra
    # zero lanes hit zero pad rows, contributing exactly 0.
    gate_tail = (lax.broadcasted_iota(jnp.int32, (1, k_gate - UIH), 1) == 0
                 ).astype(jnp.float32)
    head_tail = (lax.broadcasted_iota(jnp.int32, (1, k_head - 2 * H), 1) == 0
                 ).astype(jnp.float32)

    # Fused gate matmul LHS [u | x | h_prev | 1 | 0-pad]; one MXU push covers
    # the input, username and recurrent matmuls plus both biases.
    lhs = jnp.concatenate(
        [u_ref[...].astype(jnp.float32),
         x_ref[...].astype(jnp.float32),
         h_ref[0].astype(jnp.float32),
         gate_tail],
        axis=1)                                                   # (1, K1)
    gates = jnp.dot(lhs, wg_ref[...],
                    preferred_element_type=jnp.float32)           # (1, 4H)

    # Gate lane plan (H=32): [ i | f | o | g ] at lanes [0:H | H:2H | 2H:3H | 3H:4H].
    # c_prev loads at lanes 0..H-1, so f*c_prev and i*g each need at most one
    # lane-rotate by a fixed multiple of H (i needs none).
    sig = jax.nn.sigmoid(gates[:, :3 * H])     # one EUP pass covers i, f, o
    g = jnp.tanh(gates[:, 3 * H:4 * H])        # one EUP pass for g
    i = sig[:, :H]
    f = sig[:, H:2 * H]
    o = sig[:, 2 * H:3 * H]

    c_prev = c_ref[0].astype(jnp.float32)
    c = f * c_prev + i * g
    h = o * jnp.tanh(c)

    # Lane-dense head matmul: [h | c | 1 | 0-pad] @ wp.  The identity blocks of
    # wp copy h and c through the MXU exactly (f32: *1.0 and +0.0 are exact),
    # so one MXU op yields the full packed 128-lane row -> ONE unmasked store.
    head_lhs = jnp.concatenate([h, c, head_tail], axis=1)         # (1, K2)
    out_ref[...] = jnp.dot(head_lhs, wp_ref[...],
                           preferred_element_type=jnp.float32)    # (1, 128)


def _pad_rows(w, mult=_ROW_ALIGN):
    """Zero-pad the leading (K) dim to a multiple of `mult` sublanes."""
    pad = (-w.shape[0]) % mult
    if pad:
        w = jnp.concatenate([w, jnp.zeros((pad, w.shape[1]), w.dtype)], axis=0)
    return w


def pack_params(params):
    """One-time packing of PyTorch-layout params into kernel layout."""
    w_ih = jnp.asarray(params["w_ih"], jnp.float32)    # (4H, U+I)
    w_hh = jnp.asarray(params["w_hh"], jnp.float32)    # (4H, H)
    b_ih = jnp.asarray(params["b_ih"], jnp.float32)    # (4H,)
    b_hh = jnp.asarray(params["b_hh"], jnp.float32)    # (4H,)
    w_lin = jnp.asarray(params["w_lin"], jnp.float32)  # (O, H)
    b_lin = jnp.asarray(params["b_lin"], jnp.float32)  # (O,)
    H = w_hh.shape[1]
    O = w_lin.shape[0]
    if O + 2 * H > _OUT_LANES:
        raise ValueError(
            f"packed output requires O + 2*H <= {_OUT_LANES}; got O={O}, H={H}")

    def _reorder(w):  # PyTorch gate order [i, f, g, o] -> [i, f, o, g]
        i, f, g, o = jnp.split(w, 4, axis=-1)
        return jnp.concatenate([i, f, o, g], axis=-1)

    # Stacked gate weight so one [u|x|h|1] @ wg covers all matmuls + biases.
    w_gates = _reorder(jnp.concatenate([w_ih, w_hh], axis=1).T)     # (U+I+H, 4H)
    b_gates = _reorder((b_ih + b_hh)[None, :])                      # (1, 4H)
    wg = _pad_rows(jnp.concatenate([w_gates, b_gates], axis=0))     # (K1, 4H)

    # Lane-dense head weight: Linear head + identity copy of h and c + bias row.
    eye = jnp.eye(H, dtype=jnp.float32)
    wp = jnp.zeros((2 * H + 1, _OUT_LANES), jnp.float32)
    wp = wp.at[:H, :O].set(w_lin.T)                    # out = h @ W_lin^T ...
    wp = wp.at[2 * H, :O].set(b_lin)                   # ... + b_lin (via 1 lane)
    wp = wp.at[:H, O:O + H].set(eye)                   # copy h -> lanes [O, O+H)
    wp = wp.at[H:2 * H, O + H:O + 2 * H].set(eye)      # copy c -> lanes [O+H, O+2H)
    wp = _pad_rows(wp)                                              # (K2, 128)

    return {"wg": wg, "wp": wp}


def rnn_with_username_forward(packed, username_tensor, input_tensor, hidden,
                              *, output_size):
    """Mirrors RNN_WITH_USERNAME.forward (seq_len == 1, inference mode).

    username_tensor: (1, U) f32;  input_tensor: (1, I) f32
    hidden: (h0, c0) each (1, 1, H) f32
    returns: (output (1, O), (h1 (1,1,H), c1 (1,1,H)))
    """
    h0, c0 = hidden
    H = h0.shape[-1]
    O = output_size
    if O + 2 * H > _OUT_LANES:
        raise ValueError(
            f"packed output requires O + 2*H <= {_OUT_LANES}; got O={O}, H={H}")

    vmem = pl.BlockSpec(memory_space=pltpu.MemorySpace.VMEM)
    res = pl.pallas_call(
        _rnn_username_kernel,
        out_shape=jax.ShapeDtypeStruct((1, _OUT_LANES), jnp.float32),
        in_specs=[vmem, vmem, vmem, vmem, vmem, vmem],
        out_specs=vmem,
    )(username_tensor, input_tensor, h0, c0, packed["wg"], packed["wp"])

    out = res[:, :O]
    h1 = res[:, O:O + H].reshape(1, 1, H)
    c1 = res[:, O + H:O + 2 * H].reshape(1, 1, H)
    return out, (h1, c1)


def init_params(key, input_size, hidden_size_encoded_username,
                hidden_size, output_size):
    """Deterministic init matching the PyTorch parameter shapes/scales."""
    ks = jax.random.split(key, 6)
    in_feats = hidden_size_encoded_username + input_size
    bl = 1.0 / math.sqrt(hidden_size)
    return {
        "w_ih": jax.random.uniform(ks[0], (4 * hidden_size, in_feats),
                                   jnp.float32, -bl, bl),
        "w_hh": jax.random.uniform(ks[1], (4 * hidden_size, hidden_size),
                                   jnp.float32, -bl, bl),
        "b_ih": jax.random.uniform(ks[2], (4 * hidden_size,),
                                   jnp.float32, -bl, bl),
        "b_hh": jax.random.uniform(ks[3], (4 * hidden_size,),
                                   jnp.float32, -bl, bl),
        "w_lin": jax.random.uniform(ks[4], (output_size, hidden_size),
                                    jnp.float32, -bl, bl),
        "b_lin": jax.random.uniform(ks[5], (output_size,),
                                    jnp.float32, -bl, bl),
    }


def _reference_forward(params, username_tensor, input_tensor, hidden):
    """Pure-JAX reference (mirrors torch.nn.LSTM single step + Linear)."""
    h0, c0 = hidden
    x = jnp.concatenate([username_tensor, input_tensor], axis=1)  # (1, U+I)
    gates = (x @ params["w_ih"].T + params["b_ih"]
             + h0[0] @ params["w_hh"].T + params["b_hh"])
    H = params["w_hh"].shape[1]
    i = jax.nn.sigmoid(gates[:, 0 * H:1 * H])
    f = jax.nn.sigmoid(gates[:, 1 * H:2 * H])
    g = jnp.tanh(gates[:, 2 * H:3 * H])
    o = jax.nn.sigmoid(gates[:, 3 * H:4 * H])
    c = f * c0[0] + i * g
    h = o * jnp.tanh(c)
    out = h @ params["w_lin"].T + params["b_lin"]
    return out, (h[None], c[None])


if __name__ == "__main__":
    # Shapes implied by the module: username-encoding 16, input (one-hot
    # letter) 16, hidden 32, output vocab 16, n_layers=1, seq=1.
    U, I, H, O = 16, 16, 32, 16

    key = jax.random.PRNGKey(0)
    kp, ku, kx1, kx2 = jax.random.split(key, 4)

    params = init_params(kp, input_size=I, hidden_size_encoded_username=U,
                         hidden_size=H, output_size=O)
    packed = pack_params(params)                       # one-time packing
    packed = jax.tree_util.tree_map(jax.block_until_ready, packed)

    username_tensor = jax.random.normal(ku, (1, U), jnp.float32)
    input1 = jax.random.normal(kx1, (1, I), jnp.float32)
    input2 = jax.random.normal(kx2, (1, I), jnp.float32)
    # initHidden(): zeros (n_layers=1, batch=1, hidden_size)
    hidden0 = (jnp.zeros((1, 1, H), jnp.float32),
               jnp.zeros((1, 1, H), jnp.float32))

    fwd = jax.jit(functools.partial(rnn_with_username_forward, output_size=O))

    # Step 1 from initHidden(), step 2 feeds the returned hidden straight back
    # in (exercises the non-zero h/c path and the identity-copy writeback).
    out1, hid1 = fwd(packed, username_tensor, input1, hidden0)
    out2, hid2 = fwd(packed, username_tensor, input2, hid1)
    jax.block_until_ready((out1, out2, hid2))

    ref_out1, ref_hid1 = _reference_forward(params, username_tensor, input1,
                                            hidden0)
    ref_out2, ref_hid2 = _reference_forward(params, username_tensor, input2,
                                            ref_hid1)

    assert out1.shape == (1, O) and out2.shape == (1, O)
    assert hid2[0].shape == (1, 1, H) and hid2[1].shape == (1, 1, H)
    assert jnp.allclose(out1, ref_out1, atol=1e-5)
    assert jnp.allclose(hid1[0], ref_hid1[0], atol=1e-5)
    assert jnp.allclose(hid1[1], ref_hid1[1], atol=1e-5)
    assert jnp.allclose(out2, ref_out2, atol=1e-5)
    assert jnp.allclose(hid2[0], ref_hid2[0], atol=1e-5)
    assert jnp.allclose(hid2[1], ref_hid2[1], atol=1e-5)

    print("KERNEL_OK")
</pallas_src>

<mosaic_0001>
module attributes {stable_mosaic.version = 11 : i64} {
  func.func @_rnn_username_kernel(%arg0: memref<1x16xf32, #tpu.memory_space<vmem>>, %arg1: memref<1x16xf32, #tpu.memory_space<vmem>>, %arg2: memref<1x1x32xf32, #tpu.memory_space<vmem>>, %arg3: memref<1x1x32xf32, #tpu.memory_space<vmem>>, %arg4: memref<72x128xf32, #tpu.memory_space<vmem>>, %arg5: memref<72x128xf32, #tpu.memory_space<vmem>>, %arg6: memref<1x128xf32, #tpu.memory_space<vmem>>) attributes {dimension_semantics = [], scalar_prefetch = 0 : i64, scratch_operands = 0 : i64, tpu.core_type = #tpu.core_type<tc>} {
    %0 = tpu.iota {dimensions = array<i32: 1>} : vector<1x8xi32>
    %c0_i32 = arith.constant 0 : i32
    %1 = vector.broadcast %c0_i32 : i32 to vector<1x8xi32>
    %2 = arith.cmpi eq, %0, %1 : vector<1x8xi32>
    %3 = arith.extui %2 : vector<1x8xi1> to vector<1x8xi32>
    %4 = arith.sitofp %3 : vector<1x8xi32> to vector<1x8xf32>
    %5 = tpu.iota {dimensions = array<i32: 1>} : vector<1x8xi32>
    %c0_i32_0 = arith.constant 0 : i32
    %6 = vector.broadcast %c0_i32_0 : i32 to vector<1x8xi32>
    %7 = arith.cmpi eq, %5, %6 : vector<1x8xi32>
    %8 = arith.extui %7 : vector<1x8xi1> to vector<1x8xi32>
    %9 = arith.sitofp %8 : vector<1x8xi32> to vector<1x8xf32>
    %c0 = arith.constant 0 : index
    %c0_1 = arith.constant 0 : index
    %10 = vector.load %arg0[%c0, %c0_1] : memref<1x16xf32, #tpu.memory_space<vmem>>, vector<1x16xf32>
    %c0_2 = arith.constant 0 : index
    %c0_3 = arith.constant 0 : index
    %11 = vector.load %arg1[%c0_2, %c0_3] : memref<1x16xf32, #tpu.memory_space<vmem>>, vector<1x16xf32>
    %c0_4 = arith.constant 0 : index
    %c0_5 = arith.constant 0 : index
    %c0_6 = arith.constant 0 : index
    %12 = vector.load %arg2[%c0_4, %c0_5, %c0_6] : memref<1x1x32xf32, #tpu.memory_space<vmem>>, vector<1x1x32xf32>
    %13 = vector.shape_cast %12 : vector<1x1x32xf32> to vector<1x32xf32>
    %14 = tpu.concatenate %10, %11, %13, %4 in 1 : vector<1x16xf32>, vector<1x16xf32>, vector<1x32xf32>, vector<1x8xf32> -> vector<1x72xf32>
    %c0_7 = arith.constant 0 : index
    %c0_8 = arith.constant 0 : index
    %15 = vector.load %arg4[%c0_7, %c0_8] : memref<72x128xf32, #tpu.memory_space<vmem>>, vector<72x128xf32>
    %cst = arith.constant dense<0.000000e+00> : vector<1x128xf32>
    %16 = tpu.matmul %14, %15, %cst {dimension_numbers = #tpu.dot_dimension_numbers<[1], [0], [0], [1], [0, 0, 1, 1], [], []>} : vector<1x72xf32>, vector<72x128xf32>, vector<1x128xf32> -> vector<1x128xf32>
    %17 = vector.extract_strided_slice %16 {offsets = [0, 0], sizes = [1, 96], strides = [1, 1]} : vector<1x128xf32> to vector<1x96xf32>
    %18 = arith.negf %17 : vector<1x96xf32>
    %19 = math.exp %18 : vector<1x96xf32>
    %cst_9 = arith.constant 1.000000e+00 : f32
    %20 = vector.broadcast %cst_9 : f32 to vector<1x96xf32>
    %21 = arith.addf %20, %19 : vector<1x96xf32>
    %22 = arith.divf %20, %21 : vector<1x96xf32>
    %23 = vector.extract_strided_slice %16 {offsets = [0, 96], sizes = [1, 32], strides = [1, 1]} : vector<1x128xf32> to vector<1x32xf32>
    %24 = math.tanh %23 : vector<1x32xf32>
    %25 = vector.extract_strided_slice %22 {offsets = [0, 0], sizes = [1, 32], strides = [1, 1]} : vector<1x96xf32> to vector<1x32xf32>
    %26 = vector.extract_strided_slice %22 {offsets = [0, 32], sizes = [1, 32], strides = [1, 1]} : vector<1x96xf32> to vector<1x32xf32>
    %27 = vector.extract_strided_slice %22 {offsets = [0, 64], sizes = [1, 32], strides = [1, 1]} : vector<1x96xf32> to vector<1x32xf32>
    %c0_10 = arith.constant 0 : index
    %c0_11 = arith.constant 0 : index
    %c0_12 = arith.constant 0 : index
    %28 = vector.load %arg3[%c0_10, %c0_11, %c0_12] : memref<1x1x32xf32, #tpu.memory_space<vmem>>, vector<1x1x32xf32>
    %29 = vector.shape_cast %28 : vector<1x1x32xf32> to vector<1x32xf32>
    %30 = arith.mulf %26, %29 : vector<1x32xf32>
    %31 = arith.mulf %25, %24 : vector<1x32xf32>
    %32 = arith.addf %30, %31 : vector<1x32xf32>
    %33 = math.tanh %32 : vector<1x32xf32>
    %34 = arith.mulf %27, %33 : vector<1x32xf32>
    %35 = tpu.concatenate %34, %32, %9 in 1 : vector<1x32xf32>, vector<1x32xf32>, vector<1x8xf32> -> vector<1x72xf32>
    %c0_13 = arith.constant 0 : index
    %c0_14 = arith.constant 0 : index
    %36 = vector.load %arg5[%c0_13, %c0_14] : memref<72x128xf32, #tpu.memory_space<vmem>>, vector<72x128xf32>
    %cst_15 = arith.constant dense<0.000000e+00> : vector<1x128xf32>
    %37 = tpu.matmul %35, %36, %cst_15 {dimension_numbers = #tpu.dot_dimension_numbers<[1], [0], [0], [1], [0, 0, 1, 1], [], []>} : vector<1x72xf32>, vector<72x128xf32>, vector<1x128xf32> -> vector<1x128xf32>
    %c0_16 = arith.constant 0 : index
    %c0_17 = arith.constant 0 : index
    %38 = vector.load %arg6[%c0_16, %c0_17] : memref<1x128xf32, #tpu.memory_space<vmem>>, vector<1x128xf32>
    tpu.vector_store %arg6[%c0_16, %c0_17], %37 {strides = array<i32>} : memref<1x128xf32, #tpu.memory_space<vmem>>, vector<1x128xf32>,
    return
  }
}

</mosaic_0001>

<llo_original>
// kernel: rnn_with_username_forward.1
$region0: #{rnn_with_username_forward.1}
  #allocation0 [shape = 'u32[]', space=smem, size = 0x4, offset = 0x4, fixed_abs, tag = 'smem constant byte address 0x4 - core index']
  #allocation1 [shape = 'u32[72,128]{1,0:T(1,128)}', space=vmem, size = 0x9000, scoped, tag = 'internal scratch']
  %s0 = inlined_call_operand.vmem [shape: f32[1,16], index: 0, kind: input, shape index: {}]
  %s1 = inlined_call_operand.vmem [shape: f32[1,16], index: 1, kind: input, shape index: {}]
  %s2 = inlined_call_operand.vmem [shape: f32[1,1,32], index: 2, kind: input, shape index: {}]
  %s3 = inlined_call_operand.vmem [shape: f32[1,1,32], index: 3, kind: input, shape index: {}]
  %s4 = inlined_call_operand.hbm [shape: f32[72,128], index: 4, kind: input, shape index: {}]
  %s5 = inlined_call_operand.hbm [shape: f32[72,128], index: 5, kind: input, shape index: {}]
  %s6 = inlined_call_operand.vmem [shape: f32[1,128], index: 6, kind: output, shape index: {}]
  %s7 = sld [smem:[#allocation0]]
  $region42: #{rnn_with_username_forward.1} parent=0
    _
  %s9 = ssub.s32 1, %s7
  %s10 = scalar_select 0, %s9, %s7
  $region1: #{rnn_with_username_forward.1} parent=0
    #allocation2 [shape = 'u8[36864]{0}', space=vmem, size = 0x9000, scoped, tag = 'input window, operand 4, single buffered']
    #allocation3 [shape = 's32[1]{0}', space=sflag, size = 0x4, scoped, tag = 'scoped memory for rnn_with_username_forward.1']
    #allocation4 [shape = 'u8[36864]{0}', space=vmem, size = 0x9000, scoped, tag = 'input window, operand 5, single buffered']
    #allocation5 [shape = 's32[1]{0}', space=sflag, size = 0x4, scoped, tag = 'scoped memory for rnn_with_username_forward.1']
    %11 = vsyncpa [#allocation3], 0
    %12 = vsyncpa [#allocation5], 0
    // Predicated region
    $region2: #{rnn_with_username_forward.1} parent=1 // pred_check
      _
    $region3: #{rnn_with_username_forward.1} parent=1 // pred_check_branch
      %14 = sbr.rel (0) target = $region5
    $region4: #{rnn_with_username_forward.1} parent=1 // pred_region
      _
    $region5: #{rnn_with_username_forward.1} parent=1 // pred_fallthru
      _
    // Predicated region
    $region6: #{rnn_with_username_forward.1} parent=1 // pred_check
      _
    $region7: #{rnn_with_username_forward.1} parent=1 // pred_check_branch
      %16 = sbr.rel (0) target = $region9
    $region8: #{rnn_with_username_forward.1} parent=1 // pred_region
      _
    $region9: #{rnn_with_username_forward.1} parent=1 // pred_fallthru
      _
    // Predicated region
    $region10: #{rnn_with_username_forward.1} parent=1 // pred_check
      _
    $region11: #{rnn_with_username_forward.1} parent=1 // pred_check_branch
      %18 = sbr.rel (0) target = $region13
    $region12: #{rnn_with_username_forward.1} parent=1 // pred_region
      _
    $region13: #{rnn_with_username_forward.1} parent=1 // pred_fallthru
      _
    // Predicated region
    $region14: #{rnn_with_username_forward.1} parent=1 // pred_check
      _
    $region15: #{rnn_with_username_forward.1} parent=1 // pred_check_branch
      %20 = sbr.rel (0) target = $region17
    $region16: #{rnn_with_username_forward.1} parent=1 // pred_region
      _
    $region17: #{rnn_with_username_forward.1} parent=1 // pred_fallthru
      _
    // Predicated region
    $region18: #{rnn_with_username_forward.1} parent=1 // pred_check
      _
    $region19: #{rnn_with_username_forward.1} parent=1 // pred_check_branch
      %22 = sbr.rel (0) target = $region21
    $region20: #{rnn_with_username_forward.1} parent=1 // pred_region
      %24 = vsyncadd [#allocation3], 0
      %s25 = sshll.u32 %s4, 4
      %s26 = int_to_ptr.hbm [resolvable:$true] %s25
      %s27 = sshll.u32 [#allocation2], 4
      %s28 = int_to_ptr.vmem [resolvable:$true] %s27
      %33 = dma.hbm_to_vmem [thread:$0]  %s26, 1152, %s28, [#allocation3], 128, 128, 8
    $region21: #{rnn_with_username_forward.1} parent=1 // pred_fallthru
      _
    // Predicated region
    $region22: #{rnn_with_username_forward.1} parent=1 // pred_check
      _
    $region23: #{rnn_with_username_forward.1} parent=1 // pred_check_branch
      %35 = sbr.rel (0) target = $region25
    $region24: #{rnn_with_username_forward.1} parent=1 // pred_region
      %37 = vsyncadd [#allocation5], 0
      %s38 = sshll.u32 %s5, 4
      %s39 = int_to_ptr.hbm [resolvable:$true] %s38
      %s40 = sshll.u32 [#allocation4], 4
      %s41 = int_to_ptr.vmem [resolvable:$true] %s40
      %46 = dma.hbm_to_vmem [thread:$0]  %s39, 1152, %s41, [#allocation5], 128, 128, 8
    $region25: #{rnn_with_username_forward.1} parent=1 // pred_fallthru
      _
    // Predicated region
    $region26: #{rnn_with_username_forward.1} parent=1 // pred_check
      _
    $region27: #{rnn_with_username_forward.1} parent=1 // pred_check_branch
      %48 = sbr.rel (0) target = $region29
    $region28: #{rnn_with_username_forward.1} parent=1 // pred_region
      %50 = dma.done [#allocation3], 1152
    $region29: #{rnn_with_username_forward.1} parent=1 // pred_fallthru
      _
    // Predicated region
    $region30: #{rnn_with_username_forward.1} parent=1 // pred_check
      _
    $region31: #{rnn_with_username_forward.1} parent=1 // pred_check_branch
      %52 = sbr.rel (0) target = $region33
    $region32: #{rnn_with_username_forward.1} parent=1 // pred_region
      %54 = dma.done [#allocation5], 1152
    $region33: #{rnn_with_username_forward.1} parent=1 // pred_fallthru
      _
    %v55 = vlaneseq
    %v56 = vand.u32 %v55, 127
    %vm57 = vcmp.eq.s32.totalorder %v56, 0
    %v58 = vsel %vm57, 1, 0
    %v59 = vcvt.s32.f32 %v58
    %v60 = vld [vmem:[%s0] sm:$0x1]
    %v61 = vld [vmem:[%s1] sm:$0x1]
    %v62 = vld [vmem:[%s2] sm:$0x1]
    %v64 = vperm.slane %v61, 0
    %65 = vrot.lane.b32.xlu0 %v64, 16
    %v66 = vpop.permute.xlu0 %65
    %v69 = vperm.slane %v62, 0
    %70 = vrot.lane.b32.xlu0 %v69, 32
    %v71 = vpop.permute.xlu0 %70
    %74 = vrot.lane.b32.xlu0 %v59, 64
    %v75 = vpop.permute.xlu0 %74
    %vm77 = vcmask 130048
    %v78 = vsel %vm77, %v60, %v66
    %vm79 = vcmask 261120
    %v80 = vsel %vm79, %v78, %v71
    %vm81 = vcmask 523264
    %v82 = vsel %vm81, %v80, %v75
    %v83 = vld [vmem:[#allocation2] sm:$0xff]
    %v84 = vld [vmem:[#allocation2 + $0x8] sm:$0xff]
    %v85 = vld [vmem:[#allocation2 + $0x10] sm:$0xff]
    %v86 = vld [vmem:[#allocation2 + $0x18] sm:$0xff]
    %v87 = vld [vmem:[#allocation2 + $0x20] sm:$0xff]
    %v88 = vld [vmem:[#allocation2 + $0x28] sm:$0xff]
    %v89 = vld [vmem:[#allocation2 + $0x30] sm:$0xff]
    %v90 = vld [vmem:[#allocation2 + $0x38] sm:$0xff]
    %v91 = vld [vmem:[#allocation2 + $0x40] sm:$0xff]
    %vm92 = vcmask 588800
    %v94 = vsel %vm92, %v82, 0
    %96 = vmatpush.msra.mxu0 0.0
    %97 = vmatpush.msra.mxu0 0.0
    %98 = vmatpush.msra.mxu0 0.0
    %99 = vmatpush.msra.mxu0 0.0
    %100 = vmatpush.msra.mxu0 0.0
    %101 = vmatpush.msra.mxu0 0.0
    %102 = vmatpush.msra.mxu0 0.0
    %103 = vmatpush.msra.mxu0 %v91
    %104 = vmatpush.msra.mxu0 %v90
    %105 = vmatpush.msra.mxu0 %v89
    %106 = vmatpush.msra.mxu0 %v88
    %107 = vmatpush.msra.mxu0 %v87
    %108 = vmatpush.msra.mxu0 %v86
    %109 = vmatpush.msra.mxu0 %v85
    %110 = vmatpush.msra.mxu0 %v84
    %111 = vmatpush.msra.mxu0 %v83
    %112 = vmatmul.f32.gmra.mxu0 %v94
    %v113 = vpop.f32.mrf.mxu0
    %v114 = vadd.f32 0.0, %v113
    %115 = vdwg.mxu0
    %v116 = vxor.u32 %v114, 2147483648
    %v117 = vmul.f32 %v116, 1.442695
    %v118 = vpow.pop %v117
    %v119 = vadd.f32 %v118, 1.0
    %v120 = vrcp.pop %v119
    %v121 = vmul.f32 %v119, %v120
    %v122 = vsub.f32 1.0, %v121
    %v123 = vmul.f32 %v120, %v122
    %v124 = vadd.f32 %v120, %v123
    %vm125 = vweird.f32 %v119
    %vm126 = vweird.f32 %v120
    %vm127 = vmor %vm125, %vm126
    %v128 = vsel %vm127, %v120, %v124
    %v129 = vand.u32 2147483647, %v119
    %vm130 = vcmp.eq.f32.partialorder %v129, 8.507059e+37
    %v131 = vand.u32 %v119, 2147483648
    %v132 = vor.u32 1.1754944e-38, %v131
    %v133 = vsel %vm130, %v132, %v128
    %v134 = vmul.f32 1.0, %v133
    %v135 = vtanh.pop %v114
    %v136 = vld [vmem:[%s3] sm:$0x1]
    %v138 = vperm.slane %v136, 0
    %139 = vrot.lane.b32.xlu0 %v138, 32
    %v140 = vpop.permute.xlu0 %139
    %v142 = vmul.f32 %v134, %v140
    %144 = vrot.lane.b32.xlu0 %v135, 32
    %v145 = vpop.permute.xlu0 %144
    %v147 = vmul.f32 %v134, %v145
    %149 = vrot.lane.b32.xlu0 %v147, 32
    %v150 = vpop.permute.xlu0 %149
    %v152 = vadd.f32 %v142, %v150
    %v153 = vtanh.pop %v152
    %155 = vrot.lane.b32.xlu0 %v153, 32
    %v156 = vpop.permute.xlu0 %155
    %v158 = vmul.f32 %v134, %v156
    %160 = vrot.lane.b32.xlu0 %v158, 64
    %v161 = vpop.permute.xlu0 %160
    %v163 = vsel %vm79, %v161, %v152
    %v164 = vsel %vm81, %v163, %v75
    %v165 = vld [vmem:[#allocation4] sm:$0xff]
    %v166 = vld [vmem:[#allocation4 + $0x8] sm:$0xff]
    %v167 = vld [vmem:[#allocation4 + $0x10] sm:$0xff]
    %v168 = vld [vmem:[#allocation4 + $0x18] sm:$0xff]
    %v169 = vld [vmem:[#allocation4 + $0x20] sm:$0xff]
    %v170 = vld [vmem:[#allocation4 + $0x28] sm:$0xff]
    %v171 = vld [vmem:[#allocation4 + $0x30] sm:$0xff]
    %v172 = vld [vmem:[#allocation4 + $0x38] sm:$0xff]
    %v173 = vld [vmem:[#allocation4 + $0x40] sm:$0xff]
    %v175 = vsel %vm92, %v164, 0
    %177 = vmatpush.msra.mxu0 0.0
    %178 = vmatpush.msra.mxu0 0.0
    %179 = vmatpush.msra.mxu0 0.0
    %180 = vmatpush.msra.mxu0 0.0
    %181 = vmatpush.msra.mxu0 0.0
    %182 = vmatpush.msra.mxu0 0.0
    %183 = vmatpush.msra.mxu0 0.0
    %184 = vmatpush.msra.mxu0 %v173
    %185 = vmatpush.msra.mxu0 %v172
    %186 = vmatpush.msra.mxu0 %v171
    %187 = vmatpush.msra.mxu0 %v170
    %188 = vmatpush.msra.mxu0 %v169
    %189 = vmatpush.msra.mxu0 %v168
    %190 = vmatpush.msra.mxu0 %v167
    %191 = vmatpush.msra.mxu0 %v166
    %192 = vmatpush.msra.mxu0 %v165
    %193 = vmatmul.f32.gmra.mxu0 %v175
    %v194 = vpop.f32.mrf.mxu0
    %v195 = vadd.f32 0.0, %v194
    %196 = vdwg.mxu0
    %197 = vst [vmem:[%s6] sm:$0x1] %v195
    // Predicated region
    $region34: #{rnn_with_username_forward.1} parent=1 // pred_check
      _
    $region35: #{rnn_with_username_forward.1} parent=1 // pred_check_branch
      %199 = sbr.rel (0) target = $region37
    $region36: #{rnn_with_username_forward.1} parent=1 // pred_region
      _
    $region37: #{rnn_with_username_forward.1} parent=1 // pred_fallthru
      _
    // Predicated region
    $region38: #{rnn_with_username_forward.1} parent=1 // pred_check
      _
    $region39: #{rnn_with_username_forward.1} parent=1 // pred_check_branch
      %201 = sbr.rel (0) target = $region41
    $region40: #{rnn_with_username_forward.1} parent=1 // pred_region
      _
    $region41: #{rnn_with_username_forward.1} parent=1 // pred_fallthru
      _
    %202 = vsyncpa [#allocation3], 1
    %203 = vsyncpa [#allocation5], 1

</llo_original>
